<compile_context>
chip_gen: v7x
topology: tpu7x:2x2x1
jax: 0.10.0
libtpu: 0.0.40
codegen_flags: <defaults>
</compile_context>

<pallas_src>
import functools
import math

import jax
import jax.numpy as jnp
from jax.experimental import pallas as pl
from jax.experimental.pallas import tpu as pltpu


def _round_up(n, m):
    return ((n + m - 1) // m) * m


# ---------------------------------------------------------------------------
# Fused linear kernel:  one x tile, n_out weight blocks -> n_out outputs
#   y_i = x @ W_i + b_i          (W_i stored [in, out] = transpose of torch)
# Grid: (row_tiles, n_tiles); x is fetched once per row tile (block index is
# constant over the inner n axis, so Pallas skips the redundant DMA).
# ---------------------------------------------------------------------------
def _fused_linear_kernel(n_out, compute_dtype, x_ref, *refs):
    w_refs = refs[:n_out]
    b_refs = refs[n_out:2 * n_out]
    o_refs = refs[2 * n_out:]
    x = x_ref[...].astype(compute_dtype)
    for w_ref, b_ref, o_ref in zip(w_refs, b_refs, o_refs):
        acc = jnp.dot(x, w_ref[...].astype(compute_dtype),
                      preferred_element_type=jnp.float32)
        o_ref[...] = (acc + b_ref[...].astype(jnp.float32)).astype(o_ref.dtype)


def fused_linear_pallas(x2d, weights, biases, *, out_dtypes,
                        row_block=256, col_block=512,
                        vmem_limit=48 * 1024 * 1024):
    """x2d: [M, K]; weights: list of [K, N]; biases: list of [N] -> list of [M, N]."""
    M, K = x2d.shape
    n_out = len(weights)
    N = weights[0].shape[1]
    for w in weights:
        assert w.shape == (K, N)

    # Row tiling: full block when small (no pad copy), 256-row tiles otherwise.
    if M <= row_block:
        tm, M_p = M, M
    else:
        tm = row_block
        M_p = _round_up(M, tm)
        if M_p != M:
            x2d = jnp.pad(x2d, ((0, M_p - M), (0, 0)))

    # N tiling keeps weight residency independent of d_model (VMEM-safe on v7x)
    # and keeps the output lane-dense (tn multiple of 128, or full N).
    tn = N
    for cand in (col_block, 256, 128):
        if N >= cand and N % cand == 0:
            tn = cand
            break
    # TODO(synk): add K tiling with an f32 accumulator for very large d_model.

    grid = (M_p // tm, N // tn)
    in_specs = [pl.BlockSpec((tm, K), lambda i, j: (i, 0))]
    in_specs += [pl.BlockSpec((K, tn), lambda i, j: (0, j))] * n_out
    in_specs += [pl.BlockSpec((1, tn), lambda i, j: (0, j))] * n_out
    out_specs = [pl.BlockSpec((tm, tn), lambda i, j: (i, j))] * n_out
    out_shapes = [jax.ShapeDtypeStruct((M_p, N), dt) for dt in out_dtypes]

    outs = pl.pallas_call(
        functools.partial(_fused_linear_kernel, n_out, weights[0].dtype),
        out_shape=out_shapes,
        grid_spec=pltpu.PrefetchScalarGridSpec(
            num_scalar_prefetch=0,
            grid=grid,
            in_specs=in_specs,
            out_specs=out_specs,
        ),
        compiler_params=pltpu.CompilerParams(
            dimension_semantics=("parallel", "parallel"),
            vmem_limit_bytes=vmem_limit,
        ),
    )(x2d, *weights, *[jnp.asarray(b).reshape(1, N) for b in biases])

    if not isinstance(outs, (list, tuple)):
        outs = (outs,)
    if M_p != M:
        outs = [o[:M] for o in outs]
    return list(outs)


# ---------------------------------------------------------------------------
# Flash attention kernel over [B, S, d_model] (heads handled in-kernel)
# Grid: (B, q_tiles, kv_tiles)  with ("parallel", "parallel", "arbitrary").
# ---------------------------------------------------------------------------
def _mha_attn_kernel(h, d_k, tq, tk, scale, causal, use_mask, kv_len,
                     approx_recip, q_ref, *refs):
    if use_mask:
        k_ref, v_ref, mask_ref, o_ref, m_sc, l_sc, acc_sc = refs
    else:
        k_ref, v_ref, o_ref, m_sc, l_sc, acc_sc = refs
        mask_ref = None

    qi = pl.program_id(1)
    ki = pl.program_id(2)

    @pl.when(ki == 0)
    def _():
        m_sc[...] = jnp.full(m_sc.shape, -jnp.inf, dtype=m_sc.dtype)
        l_sc[...] = jnp.zeros(l_sc.shape, dtype=l_sc.dtype)
        acc_sc[...] = jnp.zeros(acc_sc.shape, dtype=acc_sc.dtype)

    def compute():
        q = q_ref[0]          # (tq, h*d_k)  compute dtype
        kt = k_ref[0]         # (tk, h*d_k)
        vt = v_ref[0]         # (tk, h*d_k)

        # Build the "excluded" predicate ONCE per tile (shared across heads):
        # explicit mask tile (int8) | causal (in-kernel iota) | key padding.
        excluded = None
        if use_mask:
            excluded = mask_ref[0] == 0
        need_cols = causal or (kv_len is not None)
        if need_cols:
            cols = ki * tk + jax.lax.broadcasted_iota(jnp.int32, (tq, tk), 1)
        if causal:
            rows = qi * tq + jax.lax.broadcasted_iota(jnp.int32, (tq, tk), 0)
            c = cols > rows
            excluded = c if excluded is None else (excluded | c)
        if kv_len is not None:
            p = cols >= kv_len
            excluded = p if excluded is None else (excluded | p)

        for hi in range(h):
            sl = slice(hi * d_k, (hi + 1) * d_k)
            q_h = q[:, sl]
            k_h = kt[:, sl]
            v_h = vt[:, sl]
            # scores = q @ k^T / sqrt(d_k) — bf16 operands, f32 accumulation.
            s = jax.lax.dot_general(q_h, k_h, (((1,), (1,)), ((), ())),
                                    preferred_element_type=jnp.float32) * scale
            if excluded is not None:
                # exact torch semantics: masked_fill(mask == 0, -1e9)
                s = jnp.where(excluded, jnp.float32(-1e9), s)

            m_prev = m_sc[hi]                                   # (tq, 1)
            m_new = jnp.maximum(m_prev, jnp.max(s, axis=-1, keepdims=True))
            alpha = jnp.exp(m_prev - m_new)
            p_att = jnp.exp(s - m_new)
            l_sc[hi] = alpha * l_sc[hi] + jnp.sum(p_att, axis=-1, keepdims=True)
            acc_sc[hi] = alpha * acc_sc[hi] + jnp.dot(
                p_att.astype(v_h.dtype), v_h, preferred_element_type=jnp.float32)
            m_sc[hi] = m_new

    if causal:
        # Skip kv tiles that lie entirely above the diagonal (~2x less work).
        @pl.when(ki * tk < (qi + 1) * tq)
        def _():
            compute()
    else:
        compute()

    @pl.when(ki == pl.num_programs(2) - 1)
    def _():
        outs = []
        for hi in range(h):
            inv = pl.reciprocal(l_sc[hi], approx=approx_recip)
            outs.append(acc_sc[hi] * inv)
        # Single lane-dense (tq, d_model) store; heads already merged.
        o_ref[0] = jnp.concatenate(outs, axis=-1).astype(o_ref.dtype)


def flash_attention_pallas(q, k, v, *, h, mask=None, causal=False,
                           q_block=256, kv_block=256, approx_recip=True,
                           vmem_limit=48 * 1024 * 1024):
    """q: [B, Sq, d_model], k/v: [B, Sk, d_model], mask: [B, Sq, Sk] int8 or None."""
    B, Sq, d_model = q.shape
    Sk = k.shape[1]
    d_k = d_model // h
    scale = 1.0 / math.sqrt(d_k)

    # Full-sequence blocks when small (no pad), 256-row tiles otherwise.
    # (On v5e prefer q_block=kv_block=128.)
    tq = Sq if Sq <= q_block else q_block
    tk = Sk if Sk <= kv_block else kv_block
    Sq_p = _round_up(Sq, tq)
    Sk_p = _round_up(Sk, tk)
    if Sq_p != Sq:
        q = jnp.pad(q, ((0, 0), (0, Sq_p - Sq), (0, 0)))
    if Sk_p != Sk:
        k = jnp.pad(k, ((0, 0), (0, Sk_p - Sk), (0, 0)))
        v = jnp.pad(v, ((0, 0), (0, Sk_p - Sk), (0, 0)))

    use_mask = mask is not None
    if use_mask and (Sq_p != Sq or Sk_p != Sk):
        mask = jnp.pad(mask, ((0, 0), (0, Sq_p - Sq), (0, Sk_p - Sk)))
    # Padded key columns: explicit mask handles them via the zero padding;
    # otherwise mask them in-kernel against the true length (static).
    kv_len = Sk if (Sk_p != Sk and not use_mask) else None

    if causal:
        # Clamp the K/V block index for fully-masked kv tiles so the skipped
        # steps re-use the previous block (no redundant DMA).
        def kv_idx(b, qi, ki):
            last = (qi * tq + tq - 1) // tk
            return (b, jnp.minimum(ki, last), 0)
    else:
        def kv_idx(b, qi, ki):
            return (b, ki, 0)

    in_specs = [
        pl.BlockSpec((1, tq, d_model), lambda b, qi, ki: (b, qi, 0)),
        pl.BlockSpec((1, tk, d_model), kv_idx),
        pl.BlockSpec((1, tk, d_model), kv_idx),
    ]
    args = [q, k, v]
    if use_mask:
        in_specs.append(pl.BlockSpec((1, tq, tk), lambda b, qi, ki: (b, qi, ki)))
        args.append(mask)

    kernel = functools.partial(_mha_attn_kernel, h, d_k, tq, tk, scale,
                               causal, use_mask, kv_len, approx_recip)

    out = pl.pallas_call(
        kernel,
        out_shape=jax.ShapeDtypeStruct((B, Sq_p, d_model), q.dtype),
        grid_spec=pltpu.PrefetchScalarGridSpec(
            num_scalar_prefetch=0,
            grid=(B, Sq_p // tq, Sk_p // tk),
            in_specs=in_specs,
            out_specs=pl.BlockSpec((1, tq, d_model), lambda b, qi, ki: (b, qi, 0)),
            scratch_shapes=[
                pltpu.VMEM((h, tq, 1), jnp.float32),     # running max  m_i
                pltpu.VMEM((h, tq, 1), jnp.float32),     # running sum  l_i
                pltpu.VMEM((h, tq, d_k), jnp.float32),   # per-head accumulator
            ],
        ),
        compiler_params=pltpu.CompilerParams(
            dimension_semantics=("parallel", "parallel", "arbitrary"),
            vmem_limit_bytes=vmem_limit,
        ),
    )(*args)
    return out[:, :Sq, :] if Sq_p != Sq else out


# ---------------------------------------------------------------------------
# Full MultiHeadedAttention forward
# ---------------------------------------------------------------------------
def _normalize_mask(mask, B, Sq, Sk):
    m = jnp.asarray(mask)
    if m.ndim == 4:                       # torch-style [B, 1, Sq, Sk]
        m = m.reshape(m.shape[0], m.shape[-2], m.shape[-1])
    if m.ndim == 2:
        m = m[None]
    return jnp.broadcast_to(m, (B, Sq, Sk)).astype(jnp.int8)


def mha_forward(query, key, value, wq, bq, wk, bk, wv, bv, wo, bo, *,
                h, mask=None, causal=False, compute_dtype=jnp.bfloat16):
    """query/key/value: [B, S, d_model].  Weights are [d_model, d_model]
    (transpose of torch nn.Linear layout) so y = x @ W + b.
    If causal=True the mask is generated in-kernel and `mask` is ignored."""
    B, Sq, d_model = query.shape
    Sk = key.shape[1]
    out_dtype = query.dtype
    cdt = jnp.dtype(compute_dtype)
    approx_recip = cdt != jnp.dtype(jnp.float32)

    # Store weights once in the compute dtype (halves weight DMA for bf16).
    wq_c, wk_c, wv_c, wo_c = (w.astype(cdt) for w in (wq, wk, wv, wo))

    # Projections: fused QKV when self-attention (single read of x).
    xq = query.reshape(B * Sq, d_model)
    if (query is key) and (key is value):
        q_p, k_p, v_p = fused_linear_pallas(
            xq, [wq_c, wk_c, wv_c], [bq, bk, bv], out_dtypes=[cdt] * 3)
    else:
        (q_p,) = fused_linear_pallas(xq, [wq_c], [bq], out_dtypes=[cdt])
        xk = key.reshape(B * Sk, d_model)
        if key is value:
            k_p, v_p = fused_linear_pallas(xk, [wk_c, wv_c], [bk, bv],
                                           out_dtypes=[cdt] * 2)
        else:
            (k_p,) = fused_linear_pallas(xk, [wk_c], [bk], out_dtypes=[cdt])
            xv = value.reshape(B * Sk, d_model)
            (v_p,) = fused_linear_pallas(xv, [wv_c], [bv], out_dtypes=[cdt])

    q_p = q_p.reshape(B, Sq, d_model)
    k_p = k_p.reshape(B, Sk, d_model)
    v_p = v_p.reshape(B, Sk, d_model)

    mask_b = None
    if (mask is not None) and (not causal):
        mask_b = _normalize_mask(mask, B, Sq, Sk)

    # TODO(synk): nn.Dropout(p=0.1) on the attention probs is eval-mode identity
    # here; training-mode dropout would use pltpu.prng_seed + stateful_bernoulli.
    ctx = flash_attention_pallas(q_p, k_p, v_p, h=h, mask=mask_b, causal=causal,
                                 approx_recip=approx_recip)     # [B, Sq, d_model]

    # Output projection consumes ctx directly — no head merge transpose.
    (out,) = fused_linear_pallas(ctx.reshape(B * Sq, d_model), [wo_c], [bo],
                                 out_dtypes=[out_dtype])
    return out.reshape(B, Sq, d_model)


if __name__ == "__main__":
    # Small shapes consistent with the module: batch=2, seq=8, d_model=32, heads=4
    B, S, d_model, h = 2, 8, 32, 4
    d_k = d_model // h

    root = jax.random.PRNGKey(0)
    ks = jax.random.split(root, 12)
    bound = 1.0 / math.sqrt(d_model)

    def mkw(k_):
        return jax.random.uniform(k_, (d_model, d_model), jnp.float32, -bound, bound)

    def mkb(k_):
        return jax.random.uniform(k_, (d_model,), jnp.float32, -bound, bound)

    wq, wk, wv, wo = mkw(ks[0]), mkw(ks[1]), mkw(ks[2]), mkw(ks[3])
    bq, bk, bv, bo = mkb(ks[4]), mkb(ks[5]), mkb(ks[6]), mkb(ks[7])
    x = jax.random.normal(ks[8], (B, S, d_model), jnp.float32)
    tril = jnp.tril(jnp.ones((S, S), jnp.int32))
    mask = jnp.broadcast_to(tril, (B, S, S))

    # --- pure-JAX reference (eval-mode dropout == identity) ---
    def lin(a, w, b):
        return a @ w + b

    qp = lin(x, wq, bq).reshape(B, S, h, d_k).transpose(0, 2, 1, 3)
    kp = lin(x, wk, bk).reshape(B, S, h, d_k).transpose(0, 2, 1, 3)
    vp = lin(x, wv, bv).reshape(B, S, h, d_k).transpose(0, 2, 1, 3)
    sc = jnp.einsum("bhqd,bhkd->bhqk", qp, kp) / math.sqrt(d_k)
    sc = jnp.where(mask[:, None, :, :] == 0, -1e9, sc)
    pa = jax.nn.softmax(sc, axis=-1)
    ref_x = jnp.einsum("bhqk,bhkd->bhqd", pa, vp).transpose(0, 2, 1, 3).reshape(B, S, d_model)
    ref = lin(ref_x, wo, bo)

    # 1) Causal path (in-kernel mask), f32 compute — strict check.
    out = mha_forward(x, x, x, wq, bq, wk, bk, wv, bv, wo, bo,
                      h=h, causal=True, compute_dtype=jnp.float32)
    out = jax.block_until_ready(out)
    assert out.shape == (B, S, d_model)
    assert jnp.allclose(out, ref, atol=5e-5, rtol=5e-5), float(jnp.max(jnp.abs(out - ref)))

    # 2) Explicit-mask path (int8 mask tiles), f32 compute — strict check.
    out_m = mha_forward(x, x, x, wq, bq, wk, bk, wv, bv, wo, bo,
                        h=h, mask=mask, compute_dtype=jnp.float32)
    out_m = jax.block_until_ready(out_m)
    assert jnp.allclose(out_m, ref, atol=5e-5, rtol=5e-5), float(jnp.max(jnp.abs(out_m - ref)))

    # 3) bf16 matmuls with f32 accumulation (production path) — loose check.
    out_bf = mha_forward(x, x, x, wq, bq, wk, bk, wv, bv, wo, bo,
                         h=h, causal=True, compute_dtype=jnp.bfloat16)
    out_bf = jax.block_until_ready(out_bf)
    assert jnp.allclose(out_bf.astype(jnp.float32), ref, atol=7e-2, rtol=7e-2), \
        float(jnp.max(jnp.abs(out_bf.astype(jnp.float32) - ref)))

    print("KERNEL_OK")
</pallas_src>

<mosaic_0001>
module attributes {stable_mosaic.version = 11 : i64} {
  func.func @_fused_linear_kernel(%arg0: i32, %arg1: i32, %arg2: memref<16x32xf32, #tpu.memory_space<vmem>>, %arg3: memref<32x32xf32, #tpu.memory_space<vmem>>, %arg4: memref<32x32xf32, #tpu.memory_space<vmem>>, %arg5: memref<32x32xf32, #tpu.memory_space<vmem>>, %arg6: memref<1x32xf32, #tpu.memory_space<vmem>>, %arg7: memref<1x32xf32, #tpu.memory_space<vmem>>, %arg8: memref<1x32xf32, #tpu.memory_space<vmem>>, %arg9: memref<16x32xf32, #tpu.memory_space<vmem>>, %arg10: memref<16x32xf32, #tpu.memory_space<vmem>>, %arg11: memref<16x32xf32, #tpu.memory_space<vmem>>) attributes {dimension_semantics = [#tpu.dimension_semantics<parallel>, #tpu.dimension_semantics<parallel>], iteration_bounds = array<i64: 1, 1>, scalar_prefetch = 0 : i64, scratch_operands = 0 : i64, tpu.core_type = #tpu.core_type<tc>, window_params = [{transform_indices = @transform_0, window_bounds = array<i64: 16, 32>}, {transform_indices = @transform_1, window_bounds = array<i64: 32, 32>}, {transform_indices = @transform_2, window_bounds = array<i64: 32, 32>}, {transform_indices = @transform_3, window_bounds = array<i64: 32, 32>}, {transform_indices = @transform_4, window_bounds = array<i64: 1, 32>}, {transform_indices = @transform_5, window_bounds = array<i64: 1, 32>}, {transform_indices = @transform_6, window_bounds = array<i64: 1, 32>}, {transform_indices = @transform_7, window_bounds = array<i64: 16, 32>}, {transform_indices = @transform_8, window_bounds = array<i64: 16, 32>}, {transform_indices = @transform_9, window_bounds = array<i64: 16, 32>}]} {
    %c0 = arith.constant 0 : index
    %c0_0 = arith.constant 0 : index
    %0 = vector.load %arg2[%c0, %c0_0] : memref<16x32xf32, #tpu.memory_space<vmem>>, vector<16x32xf32>
    %c0_1 = arith.constant 0 : index
    %c0_2 = arith.constant 0 : index
    %1 = vector.load %arg3[%c0_1, %c0_2] : memref<32x32xf32, #tpu.memory_space<vmem>>, vector<32x32xf32>
    %cst = arith.constant dense<0.000000e+00> : vector<16x32xf32>
    %2 = tpu.matmul %0, %1, %cst {dimension_numbers = #tpu.dot_dimension_numbers<[1], [0], [0], [1], [0, 0, 1, 1], [], []>} : vector<16x32xf32>, vector<32x32xf32>, vector<16x32xf32> -> vector<16x32xf32>
    %c0_3 = arith.constant 0 : index
    %c0_4 = arith.constant 0 : index
    %3 = vector.load %arg6[%c0_3, %c0_4] : memref<1x32xf32, #tpu.memory_space<vmem>>, vector<1x32xf32>
    %4 = vector.broadcast %3 : vector<1x32xf32> to vector<16x32xf32>
    %5 = arith.addf %2, %4 : vector<16x32xf32>
    %c0_5 = arith.constant 0 : index
    %c0_6 = arith.constant 0 : index
    %6 = vector.load %arg9[%c0_5, %c0_6] : memref<16x32xf32, #tpu.memory_space<vmem>>, vector<16x32xf32>
    tpu.vector_store %arg9[%c0_5, %c0_6], %5 {strides = array<i32>} : memref<16x32xf32, #tpu.memory_space<vmem>>, vector<16x32xf32>,
    %c0_7 = arith.constant 0 : index
    %c0_8 = arith.constant 0 : index
    %7 = vector.load %arg4[%c0_7, %c0_8] : memref<32x32xf32, #tpu.memory_space<vmem>>, vector<32x32xf32>
    %cst_9 = arith.constant dense<0.000000e+00> : vector<16x32xf32>
    %8 = tpu.matmul %0, %7, %cst_9 {dimension_numbers = #tpu.dot_dimension_numbers<[1], [0], [0], [1], [0, 0, 1, 1], [], []>} : vector<16x32xf32>, vector<32x32xf32>, vector<16x32xf32> -> vector<16x32xf32>
    %c0_10 = arith.constant 0 : index
    %c0_11 = arith.constant 0 : index
    %9 = vector.load %arg7[%c0_10, %c0_11] : memref<1x32xf32, #tpu.memory_space<vmem>>, vector<1x32xf32>
    %10 = vector.broadcast %9 : vector<1x32xf32> to vector<16x32xf32>
    %11 = arith.addf %8, %10 : vector<16x32xf32>
    %c0_12 = arith.constant 0 : index
    %c0_13 = arith.constant 0 : index
    %12 = vector.load %arg10[%c0_12, %c0_13] : memref<16x32xf32, #tpu.memory_space<vmem>>, vector<16x32xf32>
    tpu.vector_store %arg10[%c0_12, %c0_13], %11 {strides = array<i32>} : memref<16x32xf32, #tpu.memory_space<vmem>>, vector<16x32xf32>,
    %c0_14 = arith.constant 0 : index
    %c0_15 = arith.constant 0 : index
    %13 = vector.load %arg5[%c0_14, %c0_15] : memref<32x32xf32, #tpu.memory_space<vmem>>, vector<32x32xf32>
    %cst_16 = arith.constant dense<0.000000e+00> : vector<16x32xf32>
    %14 = tpu.matmul %0, %13, %cst_16 {dimension_numbers = #tpu.dot_dimension_numbers<[1], [0], [0], [1], [0, 0, 1, 1], [], []>} : vector<16x32xf32>, vector<32x32xf32>, vector<16x32xf32> -> vector<16x32xf32>
    %c0_17 = arith.constant 0 : index
    %c0_18 = arith.constant 0 : index
    %15 = vector.load %arg8[%c0_17, %c0_18] : memref<1x32xf32, #tpu.memory_space<vmem>>, vector<1x32xf32>
    %16 = vector.broadcast %15 : vector<1x32xf32> to vector<16x32xf32>
    %17 = arith.addf %14, %16 : vector<16x32xf32>
    %c0_19 = arith.constant 0 : index
    %c0_20 = arith.constant 0 : index
    %18 = vector.load %arg11[%c0_19, %c0_20] : memref<16x32xf32, #tpu.memory_space<vmem>>, vector<16x32xf32>
    tpu.vector_store %arg11[%c0_19, %c0_20], %17 {strides = array<i32>} : memref<16x32xf32, #tpu.memory_space<vmem>>, vector<16x32xf32>,
    return
  }
  func.func @transform_0(%arg0: i32, %arg1: i32) -> (i32, i32) {
    %c0_i32 = arith.constant 0 : i32
    %c0_i32_0 = arith.constant 0 : i32
    return %arg0, %c0_i32 : i32, i32
  }
  func.func @transform_1(%arg0: i32, %arg1: i32) -> (i32, i32) {
    %c0_i32 = arith.constant 0 : i32
    %c0_i32_0 = arith.constant 0 : i32
    return %c0_i32, %arg1 : i32, i32
  }
  func.func @transform_2(%arg0: i32, %arg1: i32) -> (i32, i32) {
    %c0_i32 = arith.constant 0 : i32
    %c0_i32_0 = arith.constant 0 : i32
    return %c0_i32, %arg1 : i32, i32
  }
  func.func @transform_3(%arg0: i32, %arg1: i32) -> (i32, i32) {
    %c0_i32 = arith.constant 0 : i32
    %c0_i32_0 = arith.constant 0 : i32
    return %c0_i32, %arg1 : i32, i32
  }
  func.func @transform_4(%arg0: i32, %arg1: i32) -> (i32, i32) {
    %c0_i32 = arith.constant 0 : i32
    %c0_i32_0 = arith.constant 0 : i32
    return %c0_i32, %arg1 : i32, i32
  }
  func.func @transform_5(%arg0: i32, %arg1: i32) -> (i32, i32) {
    %c0_i32 = arith.constant 0 : i32
    %c0_i32_0 = arith.constant 0 : i32
    return %c0_i32, %arg1 : i32, i32
  }
  func.func @transform_6(%arg0: i32, %arg1: i32) -> (i32, i32) {
    %c0_i32 = arith.constant 0 : i32
    %c0_i32_0 = arith.constant 0 : i32
    return %c0_i32, %arg1 : i32, i32
  }
  func.func @transform_7(%arg0: i32, %arg1: i32) -> (i32, i32) {
    %c0_i32 = arith.constant 0 : i32
    return %arg0, %arg1 : i32, i32
  }
  func.func @transform_8(%arg0: i32, %arg1: i32) -> (i32, i32) {
    %c0_i32 = arith.constant 0 : i32
    return %arg0, %arg1 : i32, i32
  }
  func.func @transform_9(%arg0: i32, %arg1: i32) -> (i32, i32) {
    %c0_i32 = arith.constant 0 : i32
    return %arg0, %arg1 : i32, i32
  }
}

</mosaic_0001>

<llo_original>
// kernel: tpu_custom_call.1
$region0: #{tpu_custom_call.1}
  #allocation0 [shape = 'u32[]', space=smem, size = 0x4, offset = 0x4, fixed_abs, tag = 'smem constant byte address 0x4 - core index']
  #allocation1 [shape = 'u32[144,128]{1,0:T(1,128)}', space=vmem, size = 0x12000, scoped, tag = 'internal scratch']
  %s0 = inlined_call_operand.hbm [shape: f32[16,32], index: 0, kind: input, shape index: {}]
  %s1 = inlined_call_operand.hbm [shape: f32[32,32], index: 1, kind: input, shape index: {}]
  %s2 = inlined_call_operand.hbm [shape: f32[32,32], index: 2, kind: input, shape index: {}]
  %s3 = inlined_call_operand.hbm [shape: f32[32,32], index: 3, kind: input, shape index: {}]
  %s4 = inlined_call_operand.vmem [shape: f32[1,32], index: 4, kind: input, shape index: {}]
  %s5 = inlined_call_operand.vmem [shape: f32[1,32], index: 5, kind: input, shape index: {}]
  %s6 = inlined_call_operand.vmem [shape: f32[1,32], index: 6, kind: input, shape index: {}]
  %s7 = inlined_call_operand.hbm [shape: f32[16,32], index: 7, kind: output, shape index: {0}]
  %s8 = inlined_call_operand.hbm [shape: f32[16,32], index: 8, kind: output, shape index: {1}]
  %s9 = inlined_call_operand.hbm [shape: f32[16,32], index: 9, kind: output, shape index: {2}]
  %10 = xla_tuple %s7, %s8, %s9
  %s11 = sld [smem:[#allocation0]]
  $region70: #{tpu_custom_call.1} parent=0
    _
  %s13 = ssub.s32 1, %s11
  %s14 = scalar_select 0, %s13, %s11
  $region1: #{tpu_custom_call.1} parent=0
    #allocation2 [shape = 'u8[8192]{0}', space=vmem, size = 0x2000, scoped, tag = 'input window, operand 0, single buffered']
    #allocation3 [shape = 's32[1]{0}', space=sflag, size = 0x4, scoped, tag = 'scoped memory for tpu_custom_call.1']
    #allocation4 [shape = 's32[1]{0}', space=sflag, size = 0x4, scoped, tag = 'scoped memory for tpu_custom_call.1']
    #allocation5 [shape = 'u8[16384]{0}', space=vmem, size = 0x4000, scoped, tag = 'input window, operand 1, single buffered']
    #allocation6 [shape = 's32[1]{0}', space=sflag, size = 0x4, scoped, tag = 'scoped memory for tpu_custom_call.1']
    #allocation7 [shape = 'u8[16384]{0}', space=vmem, size = 0x4000, scoped, tag = 'input window, operand 2, single buffered']
    #allocation8 [shape = 'u8[16384]{0}', space=vmem, size = 0x4000, scoped, tag = 'input window, operand 3, single buffered']
    #allocation9 [shape = 's32[1]{0}', space=sflag, size = 0x4, scoped, tag = 'scoped memory for tpu_custom_call.1']
    #allocation10 [shape = 'u8[8192]{0}', space=vmem, size = 0x2000, scoped, tag = 'output window, operand 0, single buffered']
    #allocation11 [shape = 'u8[8192]{0}', space=vmem, size = 0x2000, scoped, tag = 'output window, operand 1, single buffered']
    #allocation12 [shape = 's32[1]{0}', space=sflag, size = 0x4, scoped, tag = 'scoped memory for tpu_custom_call.1']
    #allocation13 [shape = 'u8[8192]{0}', space=vmem, size = 0x2000, scoped, tag = 'output window, operand 2, single buffered']
    %15 = vsyncpa [#allocation3], 0
    %16 = vsyncpa [#allocation6], 0
    %17 = vsyncpa [#allocation9], 0
    %18 = vsyncpa [#allocation4], 0
    %19 = vsyncpa [#allocation12], 0
    // Predicated region
    $region2: #{tpu_custom_call.1} parent=1 // pred_check
      _
    $region3: #{tpu_custom_call.1} parent=1 // pred_check_branch
      %21 = sbr.rel (0) target = $region5
    $region4: #{tpu_custom_call.1} parent=1 // pred_region
      %s23 = ssub.s32 256, 256
      %24 = vsyncadd [#allocation3], %s23
      %s25 = sshll.u32 [#allocation2], 4
      %s26 = int_to_ptr.vmem [resolvable:$true] %s25
      %31 = dma.hbm_to_vmem [thread:$0]  %s0, 256, %s26, [#allocation3], 128, 128, 8
    $region5: #{tpu_custom_call.1} parent=1 // pred_fallthru
      _
    // Predicated region
    $region6: #{tpu_custom_call.1} parent=1 // pred_check
      _
    $region7: #{tpu_custom_call.1} parent=1 // pred_check_branch
      %33 = sbr.rel (0) target = $region9
    $region8: #{tpu_custom_call.1} parent=1 // pred_region
      %s35 = ssub.s32 512, 512
      %36 = vsyncadd [#allocation6], %s35
      %s37 = sshll.u32 [#allocation5], 4
      %s38 = int_to_ptr.vmem [resolvable:$true] %s37
      %43 = dma.hbm_to_vmem [thread:$0]  %s1, 512, %s38, [#allocation6], 128, 128, 8
    $region9: #{tpu_custom_call.1} parent=1 // pred_fallthru
      _
    // Predicated region
    $region10: #{tpu_custom_call.1} parent=1 // pred_check
      _
    $region11: #{tpu_custom_call.1} parent=1 // pred_check_branch
      %45 = sbr.rel (0) target = $region13
    $region12: #{tpu_custom_call.1} parent=1 // pred_region
      %s47 = ssub.s32 512, 512
      %48 = vsyncadd [#allocation6], %s47
      %s49 = sshll.u32 [#allocation7], 4
      %s50 = int_to_ptr.vmem [resolvable:$true] %s49
      %55 = dma.hbm_to_vmem [thread:$0]  %s2, 512, %s50, [#allocation6], 128, 128, 8
    $region13: #{tpu_custom_call.1} parent=1 // pred_fallthru
      _
    // Predicated region
    $region14: #{tpu_custom_call.1} parent=1 // pred_check
      _
    $region15: #{tpu_custom_call.1} parent=1 // pred_check_branch
      %57 = sbr.rel (0) target = $region17
    $region16: #{tpu_custom_call.1} parent=1 // pred_region
      %s59 = ssub.s32 512, 512
      %60 = vsyncadd [#allocation9], %s59
      %s61 = sshll.u32 [#allocation8], 4
      %s62 = int_to_ptr.vmem [resolvable:$true] %s61
      %67 = dma.hbm_to_vmem [thread:$0]  %s3, 512, %s62, [#allocation9], 128, 128, 8
    $region17: #{tpu_custom_call.1} parent=1 // pred_fallthru
      _
    // Predicated region
    $region18: #{tpu_custom_call.1} parent=1 // pred_check
      _
    $region19: #{tpu_custom_call.1} parent=1 // pred_check_branch
      %69 = sbr.rel (0) target = $region21
    $region20: #{tpu_custom_call.1} parent=1 // pred_region
      _
    $region21: #{tpu_custom_call.1} parent=1 // pred_fallthru
      _
    // Predicated region
    $region22: #{tpu_custom_call.1} parent=1 // pred_check
      _
    $region23: #{tpu_custom_call.1} parent=1 // pred_check_branch
      %71 = sbr.rel (0) target = $region25
    $region24: #{tpu_custom_call.1} parent=1 // pred_region
      _
    $region25: #{tpu_custom_call.1} parent=1 // pred_fallthru
      _
    // Predicated region
    $region26: #{tpu_custom_call.1} parent=1 // pred_check
      _
    $region27: #{tpu_custom_call.1} parent=1 // pred_check_branch
      %73 = sbr.rel (0) target = $region29
    $region28: #{tpu_custom_call.1} parent=1 // pred_region
      _
    $region29: #{tpu_custom_call.1} parent=1 // pred_fallthru
      _
    // Predicated region
    $region30: #{tpu_custom_call.1} parent=1 // pred_check
      _
    $region31: #{tpu_custom_call.1} parent=1 // pred_check_branch
      %75 = sbr.rel (0) target = $region33
    $region32: #{tpu_custom_call.1} parent=1 // pred_region
      %76 = dma.done [#allocation3], 256
    $region33: #{tpu_custom_call.1} parent=1 // pred_fallthru
      _
    // Predicated region
    $region34: #{tpu_custom_call.1} parent=1 // pred_check
      _
    $region35: #{tpu_custom_call.1} parent=1 // pred_check_branch
      %78 = sbr.rel (0) target = $region37
    $region36: #{tpu_custom_call.1} parent=1 // pred_region
      %79 = dma.done [#allocation6], 512
    $region37: #{tpu_custom_call.1} parent=1 // pred_fallthru
      _
    // Predicated region
    $region38: #{tpu_custom_call.1} parent=1 // pred_check
      _
    $region39: #{tpu_custom_call.1} parent=1 // pred_check_branch
      %81 = sbr.rel (0) target = $region41
    $region40: #{tpu_custom_call.1} parent=1 // pred_region
      %82 = dma.done [#allocation6], 512
    $region41: #{tpu_custom_call.1} parent=1 // pred_fallthru
      _
    // Predicated region
    $region42: #{tpu_custom_call.1} parent=1 // pred_check
      _
    $region43: #{tpu_custom_call.1} parent=1 // pred_check_branch
      %84 = sbr.rel (0) target = $region45
    $region44: #{tpu_custom_call.1} parent=1 // pred_region
      %85 = dma.done [#allocation9], 512
    $region45: #{tpu_custom_call.1} parent=1 // pred_fallthru
      _
    %v86 = vld [vmem:[#allocation2] sm:$0xff]
    %v87 = vld [vmem:[#allocation2 + $0x8] sm:$0xff]
    %v88 = vld [vmem:[#allocation5] sm:$0xff]
    %v89 = vld [vmem:[#allocation5 + $0x8] sm:$0xff]
    %v90 = vld [vmem:[#allocation5 + $0x10] sm:$0xff]
    %v91 = vld [vmem:[#allocation5 + $0x18] sm:$0xff]
    %v92 = vld [vmem:[%s4] sm:$0x1]
    %v94 = vlaneseq
    %v95 = vshrl.u32 %v94, 7
    %v96 = vsub.s32 0, %v95
    %v97 = vrot.slane %v92, %v96
    %vm99 = vcmask 261120
    %v101 = vsel %vm99, %v86, 0
    %v104 = vsel %vm99, %v87, 0
    %106 = vmatprep.subr.mxu0 0.0
    %107 = vmatpush1.msra.mxu0 %v88
    %108 = vmatprep.subr.mxu0 0.0
    %109 = vmatpush1.msra.mxu0 %v89
    %110 = vmatprep.subr.mxu0 0.0
    %111 = vmatpush1.msra.mxu0 %v90
    %112 = vmatprep.subr.mxu0 0.0
    %113 = vmatpush1.msra.mxu0 %v91
    %114 = vmatprep.subr.mxu0 0.0
    %115 = vmatpush1.msra.mxu0 0.0
    %116 = vmatprep.subr.mxu0 0.0
    %117 = vmatpush1.msra.mxu0 0.0
    %118 = vmatprep.subr.mxu0 0.0
    %119 = vmatpush1.msra.mxu0 0.0
    %120 = vmatprep.subr.mxu0 0.0
    %121 = vmatpush1.msra.mxu0 0.0
    %122 = vmatprep.subr.mxu0 0.0
    %123 = vmatpush1.msra.mxu0 0.0
    %124 = vmatprep.subr.mxu0 0.0
    %125 = vmatpush1.msra.mxu0 0.0
    %126 = vmatprep.subr.mxu0 0.0
    %127 = vmatpush1.msra.mxu0 0.0
    %128 = vmatprep.subr.mxu0 0.0
    %129 = vmatpush1.msra.mxu0 0.0
    %130 = vmatprep.subr.mxu0 0.0
    %131 = vmatpush1.msra.mxu0 0.0
    %132 = vmatprep.subr.mxu0 0.0
    %133 = vmatpush1.msra.mxu0 0.0
    %134 = vmatprep.subr.mxu0 0.0
    %135 = vmatpush1.msra.mxu0 0.0
    %136 = vmatprep.subr.mxu0 0.0
    %137 = vmatpush1.msra.mxu0 0.0
    %138 = vmatprep.subr.mxu0 0.0
    %139 = vmatpush1.msra.mxu0 0.0
    %140 = vmatprep.subr.mxu0 0.0
    %141 = vmatpush1.msra.mxu0 0.0
    %142 = vmatprep.subr.mxu0 0.0
    %143 = vmatpush1.msra.mxu0 0.0
    %144 = vmatprep.subr.mxu0 0.0
    %145 = vmatpush1.msra.mxu0 0.0
    %146 = vmatprep.subr.mxu0 0.0
    %147 = vmatpush1.msra.mxu0 0.0
    %148 = vmatprep.subr.mxu0 0.0
    %149 = vmatpush1.msra.mxu0 0.0
    %150 = vmatprep.subr.mxu0 0.0
    %151 = vmatpush1.msra.mxu0 0.0
    %152 = vmatprep.subr.mxu0 0.0
    %153 = vmatpush1.msra.mxu0 0.0
    %154 = vmatprep.subr.mxu0 0.0
    %155 = vmatpush1.msra.mxu0 0.0
    %156 = vmatprep.subr.mxu0 0.0
    %157 = vmatpush1.msra.mxu0 0.0
    %158 = vmatprep.subr.mxu0 0.0
    %159 = vmatpush1.msra.mxu0 0.0
    %160 = vmatprep.subr.mxu0 0.0
    %161 = vmatpush1.msra.mxu0 0.0
    %162 = vmatprep.subr.mxu0 0.0
    %163 = vmatpush1.msra.mxu0 0.0
    %164 = vmatprep.subr.mxu0 0.0
    %165 = vmatpush1.msra.mxu0 0.0
    %166 = vmatprep.subr.mxu0 0.0
    %167 = vmatpush1.msra.mxu0 0.0
    %168 = vmatprep.subr.mxu0 0.0
    %169 = vmatpush1.msra.mxu0 0.0
    %170 = vmatprep.mubr.f32.mxu0 0.0
    %171 = vmatmul.mubr.f32.gmra.mrb[0].mxu0 %v101
    %v172 = vpop.f32.mrb[0].mxu0
    %v173 = vadd.f32 %v97, %v172
    %v174 = vpop.f32.mrb[0].mxu0
    %175 = vmatprep.mubr.f32.mxu0 0.0
    %176 = vmatmul.mubr.f32.gmra.mrb[0].mxu0 %v104
    %v177 = vpop.f32.mrb[0].mxu0
    %v178 = vadd.f32 %v97, %v177
    %v179 = vpop.f32.mrb[0].mxu0
    %180 = vdwg.mxu0
    %181 = vst.msk [vmem:[#allocation10] sm:$0xff] %vm99, %v173
    %182 = vst.msk [vmem:[#allocation10 + $0x8] sm:$0xff] %vm99, %v178
    %v183 = vld [vmem:[#allocation7] sm:$0xff]
    %v184 = vld [vmem:[#allocation7 + $0x8] sm:$0xff]
    %v185 = vld [vmem:[#allocation7 + $0x10] sm:$0xff]
    %v186 = vld [vmem:[#allocation7 + $0x18] sm:$0xff]
    %v187 = vld [vmem:[%s5] sm:$0x1]
    %v189 = vlaneseq
    %v190 = vshrl.u32 %v189, 7
    %v191 = vsub.s32 0, %v190
    %v192 = vrot.slane %v187, %v191
    %194 = vmatprep.subr.mxu0 0.0
    %195 = vmatpush1.msra.mxu0 %v183
    %196 = vmatprep.subr.mxu0 0.0
    %197 = vmatpush1.msra.mxu0 %v184
    %198 = vmatprep.subr.mxu0 0.0
    %199 = vmatpush1.msra.mxu0 %v185
    %200 = vmatprep.subr.mxu0 0.0
    %201 = vmatpush1.msra.mxu0 %v186
    %202 = vmatprep.subr.mxu0 0.0
    %203 = vmatpush1.msra.mxu0 0.0
    %204 = vmatprep.subr.mxu0 0.0
    %205 = vmatpush1.msra.mxu0 0.0
    %206 = vmatprep.subr.mxu0 0.0
    %207 = vmatpush1.msra.mxu0 0.0
    %208 = vmatprep.subr.mxu0 0.0
    %209 = vmatpush1.msra.mxu0 0.0
    %210 = vmatprep.subr.mxu0 0.0
    %211 = vmatpush1.msra.mxu0 0.0
    %212 = vmatprep.subr.mxu0 0.0
    %213 = vmatpush1.msra.mxu0 0.0
    %214 = vmatprep.subr.mxu0 0.0
    %215 = vmatpush1.msra.mxu0 0.0
    %216 = vmatprep.subr.mxu0 0.0
    %217 = vmatpush1.msra.mxu0 0.0
    %218 = vmatprep.subr.mxu0 0.0
    %219 = vmatpush1.msra.mxu0 0.0
    %220 = vmatprep.subr.mxu0 0.0
    %221 = vmatpush1.msra.mxu0 0.0
    %222 = vmatprep.subr.mxu0 0.0
    %223 = vmatpush1.msra.mxu0 0.0
    %224 = vmatprep.subr.mxu0 0.0
    %225 = vmatpush1.msra.mxu0 0.0
    %226 = vmatprep.subr.mxu0 0.0
    %227 = vmatpush1.msra.mxu0 0.0
    %228 = vmatprep.subr.mxu0 0.0
    %229 = vmatpush1.msra.mxu0 0.0
    %230 = vmatprep.subr.mxu0 0.0
    %231 = vmatpush1.msra.mxu0 0.0
    %232 = vmatprep.subr.mxu0 0.0
    %233 = vmatpush1.msra.mxu0 0.0
    %234 = vmatprep.subr.mxu0 0.0
    %235 = vmatpush1.msra.mxu0 0.0
    %236 = vmatprep.subr.mxu0 0.0
    %237 = vmatpush1.msra.mxu0 0.0
    %238 = vmatprep.subr.mxu0 0.0
    %239 = vmatpush1.msra.mxu0 0.0
    %240 = vmatprep.subr.mxu0 0.0
    %241 = vmatpush1.msra.mxu0 0.0
    %242 = vmatprep.subr.mxu0 0.0
    %243 = vmatpush1.msra.mxu0 0.0
    %244 = vmatprep.subr.mxu0 0.0
    %245 = vmatpush1.msra.mxu0 0.0
    %246 = vmatprep.subr.mxu0 0.0
    %247 = vmatpush1.msra.mxu0 0.0
    %248 = vmatprep.subr.mxu0 0.0
    %249 = vmatpush1.msra.mxu0 0.0
    %250 = vmatprep.subr.mxu0 0.0
    %251 = vmatpush1.msra.mxu0 0.0
    %252 = vmatprep.subr.mxu0 0.0
    %253 = vmatpush1.msra.mxu0 0.0
    %254 = vmatprep.subr.mxu0 0.0
    %255 = vmatpush1.msra.mxu0 0.0
    %256 = vmatprep.subr.mxu0 0.0
    %257 = vmatpush1.msra.mxu0 0.0
    %258 = vmatprep.mubr.f32.mxu0 0.0
    %259 = vmatmul.mubr.f32.gmra.mrb[0].mxu0 %v101
    %v260 = vpop.f32.mrb[0].mxu0
    %v261 = vadd.f32 %v192, %v260
    %v262 = vpop.f32.mrb[0].mxu0
    %263 = vmatprep.mubr.f32.mxu0 0.0
    %264 = vmatmul.mubr.f32.gmra.mrb[0].mxu0 %v104
    %v265 = vpop.f32.mrb[0].mxu0
    %v266 = vadd.f32 %v192, %v265
    %v267 = vpop.f32.mrb[0].mxu0
    %268 = vdwg.mxu0
    %269 = vst.msk [vmem:[#allocation11] sm:$0xff] %vm99, %v261
    %270 = vst.msk [vmem:[#allocation11 + $0x8] sm:$0xff] %vm99, %v266
    %v271 = vld [vmem:[#allocation8] sm:$0xff]
    %v272 = vld [vmem:[#allocation8 + $0x8] sm:$0xff]
    %v273 = vld [vmem:[#allocation8 + $0x10] sm:$0xff]
    %v274 = vld [vmem:[#allocation8 + $0x18] sm:$0xff]
    %v275 = vld [vmem:[%s6] sm:$0x1]
    %v277 = vlaneseq
    %v278 = vshrl.u32 %v277, 7
    %v279 = vsub.s32 0, %v278
    %v280 = vrot.slane %v275, %v279
    %282 = vmatprep.subr.mxu0 0.0
    %283 = vmatpush1.msra.mxu0 %v271
    %284 = vmatprep.subr.mxu0 0.0
    %285 = vmatpush1.msra.mxu0 %v272
    %286 = vmatprep.subr.mxu0 0.0
    %287 = vmatpush1.msra.mxu0 %v273
    %288 = vmatprep.subr.mxu0 0.0
    %289 = vmatpush1.msra.mxu0 %v274
    %290 = vmatprep.subr.mxu0 0.0
    %291 = vmatpush1.msra.mxu0 0.0
    %292 = vmatprep.subr.mxu0 0.0
    %293 = vmatpush1.msra.mxu0 0.0
    %294 = vmatprep.subr.mxu0 0.0
    %295 = vmatpush1.msra.mxu0 0.0
    %296 = vmatprep.subr.mxu0 0.0
    %297 = vmatpush1.msra.mxu0 0.0
    %298 = vmatprep.subr.mxu0 0.0
    %299 = vmatpush1.msra.mxu0 0.0
    %300 = vmatprep.subr.mxu0 0.0
    %301 = vmatpush1.msra.mxu0 0.0
    %302 = vmatprep.subr.mxu0 0.0
    %303 = vmatpush1.msra.mxu0 0.0
    %304 = vmatprep.subr.mxu0 0.0
    %305 = vmatpush1.msra.mxu0 0.0
    %306 = vmatprep.subr.mxu0 0.0
    %307 = vmatpush1.msra.mxu0 0.0
    %308 = vmatprep.subr.mxu0 0.0
    %309 = vmatpush1.msra.mxu0 0.0
    %310 = vmatprep.subr.mxu0 0.0
    %311 = vmatpush1.msra.mxu0 0.0
    %312 = vmatprep.subr.mxu0 0.0
    %313 = vmatpush1.msra.mxu0 0.0
    %314 = vmatprep.subr.mxu0 0.0
    %315 = vmatpush1.msra.mxu0 0.0
    %316 = vmatprep.subr.mxu0 0.0
    %317 = vmatpush1.msra.mxu0 0.0
    %318 = vmatprep.subr.mxu0 0.0
    %319 = vmatpush1.msra.mxu0 0.0
    %320 = vmatprep.subr.mxu0 0.0
    %321 = vmatpush1.msra.mxu0 0.0
    %322 = vmatprep.subr.mxu0 0.0
    %323 = vmatpush1.msra.mxu0 0.0
    %324 = vmatprep.subr.mxu0 0.0
    %325 = vmatpush1.msra.mxu0 0.0
    %326 = vmatprep.subr.mxu0 0.0
    %327 = vmatpush1.msra.mxu0 0.0
    %328 = vmatprep.subr.mxu0 0.0
    %329 = vmatpush1.msra.mxu0 0.0
    %330 = vmatprep.subr.mxu0 0.0
    %331 = vmatpush1.msra.mxu0 0.0
    %332 = vmatprep.subr.mxu0 0.0
    %333 = vmatpush1.msra.mxu0 0.0
    %334 = vmatprep.subr.mxu0 0.0
    %335 = vmatpush1.msra.mxu0 0.0
    %336 = vmatprep.subr.mxu0 0.0
    %337 = vmatpush1.msra.mxu0 0.0
    %338 = vmatprep.subr.mxu0 0.0
    %339 = vmatpush1.msra.mxu0 0.0
    %340 = vmatprep.subr.mxu0 0.0
    %341 = vmatpush1.msra.mxu0 0.0
    %342 = vmatprep.subr.mxu0 0.0
    %343 = vmatpush1.msra.mxu0 0.0
    %344 = vmatprep.subr.mxu0 0.0
    %345 = vmatpush1.msra.mxu0 0.0
    %346 = vmatprep.mubr.f32.mxu0 0.0
    %347 = vmatmul.mubr.f32.gmra.mrb[0].mxu0 %v101
    %v348 = vpop.f32.mrb[0].mxu0
    %v349 = vadd.f32 %v280, %v348
    %v350 = vpop.f32.mrb[0].mxu0
    %351 = vmatprep.mubr.f32.mxu0 0.0
    %352 = vmatmul.mubr.f32.gmra.mrb[0].mxu0 %v104
    %v353 = vpop.f32.mrb[0].mxu0
    %v354 = vadd.f32 %v280, %v353
    %v355 = vpop.f32.mrb[0].mxu0
    %356 = vdwg.mxu0
    %357 = vst.msk [vmem:[#allocation13] sm:$0xff] %vm99, %v349
    %358 = vst.msk [vmem:[#allocation13 + $0x8] sm:$0xff] %vm99, %v354
    // Predicated region
    $region46: #{tpu_custom_call.1} parent=1 // pred_check
      _
    $region47: #{tpu_custom_call.1} parent=1 // pred_check_branch
      %360 = sbr.rel (0) target = $region49
    $region48: #{tpu_custom_call.1} parent=1 // pred_region
      %s362 = ssub.s32 256, 256
      %363 = vsyncadd [#allocation4], %s362
      %s364 = sshll.u32 [#allocation10], 4
      %s365 = int_to_ptr.vmem [resolvable:$true] %s364
      %370 = dma.vmem_to_hbm [thread:$0]  %s365, 256, %s7, [#allocation4], 128, 128, 8
    $region49: #{tpu_custom_call.1} parent=1 // pred_fallthru
      _
    // Predicated region
    $region50: #{tpu_custom_call.1} parent=1 // pred_check
      _
    $region51: #{tpu_custom_call.1} parent=1 // pred_check_branch
      %372 = sbr.rel (0) target = $region53
    $region52: #{tpu_custom_call.1} parent=1 // pred_region
      %s374 = ssub.s32 256, 256
      %375 = vsyncadd [#allocation12], %s374
      %s376 = sshll.u32 [#allocation11], 4
      %s377 = int_to_ptr.vmem [resolvable:$true] %s376
      %382 = dma.vmem_to_hbm [thread:$0]  %s377, 256, %s8, [#allocation12], 128, 128, 8
    $region53: #{tpu_custom_call.1} parent=1 // pred_fallthru
      _
    // Predicated region
    $region54: #{tpu_custom_call.1} parent=1 // pred_check
      _
    $region55: #{tpu_custom_call.1} parent=1 // pred_check_branch
      %384 = sbr.rel (0) target = $region57
    $region56: #{tpu_custom_call.1} parent=1 // pred_region
      %s386 = ssub.s32 256, 256
      %387 = vsyncadd [#allocation12], %s386
      %s388 = sshll.u32 [#allocation13], 4
      %s389 = int_to_ptr.vmem [resolvable:$true] %s388
      %394 = dma.vmem_to_hbm [thread:$0]  %s389, 256, %s9, [#allocation12], 128, 128, 8
    $region57: #{tpu_custom_call.1} parent=1 // pred_fallthru
      _
    // Predicated region
    $region58: #{tpu_custom_call.1} parent=1 // pred_check
      _
    $region59: #{tpu_custom_call.1} parent=1 // pred_check_branch
      %396 = sbr.rel (0) target = $region61
    $region60: #{tpu_custom_call.1} parent=1 // pred_region
      %397 = dma.done [#allocation4], 256
    $region61: #{tpu_custom_call.1} parent=1 // pred_fallthru
      _
    // Predicated region
    $region62: #{tpu_custom_call.1} parent=1 // pred_check
      _
    $region63: #{tpu_custom_call.1} parent=1 // pred_check_branch
      %399 = sbr.rel (0) target = $region65
    $region64: #{tpu_custom_call.1} parent=1 // pred_region
      %400 = dma.done [#allocation12], 256
    $region65: #{tpu_custom_call.1} parent=1 // pred_fallthru
      _
    // Predicated region
    $region66: #{tpu_custom_call.1} parent=1 // pred_check
      _
    $region67: #{tpu_custom_call.1} parent=1 // pred_check_branch
      %402 = sbr.rel (0) target = $region69
    $region68: #{tpu_custom_call.1} parent=1 // pred_region
      %403 = dma.done [#allocation12], 256
    $region69: #{tpu_custom_call.1} parent=1 // pred_fallthru
      _
    %404 = vsyncpa [#allocation3], 1
    %405 = vsyncpa [#allocation6], 1
    %406 = vsyncpa [#allocation9], 1
    %407 = vsyncpa [#allocation4], 1
    %408 = vsyncpa [#allocation12], 1

</llo_original>
